<compile_context>
chip_gen: v5e
topology: v5e:2x2
jax: 0.10.0
libtpu: 0.0.40
codegen_flags: <defaults>
</compile_context>

<pallas_src>
import functools

import jax
import jax.numpy as jnp
from jax.experimental import pallas as pl
from jax.experimental.pallas import tpu as pltpu


def _round_up(n, m):
    return ((n + m - 1) // m) * m


# -----------------------------------------------------------------------------
# Parameter packing: weights -> one (rows, lane) array, biases -> one (8, lane)
# array.  Row offsets are multiples of 8 (sublane aligned static ref slices);
# lane width is padded to a multiple of 128.  Pad columns are zero so the head
# matmul can be computed at full lane width (lane-dense store) for free.
# -----------------------------------------------------------------------------
def pack_params(params, input_size, hidden_size, output_size):
    hid = hidden_size
    out_total = output_size + 6
    lane = _round_up(max(4 * hid, hid, out_total), 128)

    seg_fx = _round_up(input_size, 8)
    seg_g = _round_up(2 * hid, 8)
    seg_hz = _round_up(hid, 8)
    seg_hd = _round_up(hid, 8)
    r_fx = 0
    r_g = r_fx + seg_fx
    r_hz = r_g + seg_g
    r_hd = r_hz + seg_hz
    rows = r_hd + seg_hd

    # Fused gate weight: columns ordered [i | g | o | m], rows [x-part ; h-part]
    w_x_gates = jnp.concatenate(
        [params["w_xi"], params["w_xg"], params["w_xo"], params["w_xm"]], axis=1)
    w_h_gates = jnp.concatenate(
        [params["w_hi"], params["w_hg"], params["w_ho"], params["w_hm"]], axis=1)
    w_gates = jnp.concatenate([w_x_gates, w_h_gates], axis=0)            # (2H, 4H)
    w_head = jnp.concatenate([params["w_zs"], params["w_zm"]], axis=1)   # (H, out+6)

    W = jnp.zeros((rows, lane), jnp.float32)
    W = W.at[r_fx:r_fx + input_size, 0:hid].set(params["w_fx"])
    W = W.at[r_g:r_g + 2 * hid, 0:4 * hid].set(w_gates)
    W = W.at[r_hz:r_hz + hid, 0:hid].set(params["w_hz"])
    W = W.at[r_hd:r_hd + hid, 0:out_total].set(w_head)

    b_gates = jnp.concatenate(
        [params["b_xi"] + params["b_hi"], params["b_xg"] + params["b_hg"],
         params["b_xo"] + params["b_ho"], params["b_xm"] + params["b_hm"]], axis=1)
    b_head = jnp.concatenate([params["b_zs"], params["b_zm"]], axis=1)

    B = jnp.zeros((8, lane), jnp.float32)
    B = B.at[0:1, 0:hid].set(params["b_fx"])
    B = B.at[1:2, 0:4 * hid].set(b_gates)
    B = B.at[2:3, 0:hid].set(params["b_hz"])
    B = B.at[3:4, 0:out_total].set(b_head)

    geom = dict(in_sz=input_size, hid=hid, out_size=output_size,
                out_total=out_total, lane=lane,
                r_fx=r_fx, r_g=r_g, r_hz=r_hz, r_hd=r_hd)
    return W, B, geom


# -----------------------------------------------------------------------------
# Loop-invariant loads: weight sub-tiles + pre-broadcast biases (hoisted out of
# the per-timestep body so they are read/broadcast once per kernel invocation).
# -----------------------------------------------------------------------------
def _load_weights(w_ref, b_ref, geom, batch):
    in_sz, hid, lane = geom["in_sz"], geom["hid"], geom["lane"]
    r_fx, r_g, r_hz, r_hd = geom["r_fx"], geom["r_g"], geom["r_hz"], geom["r_hd"]

    b_all = b_ref[...]
    return dict(
        w_fx=w_ref[r_fx:r_fx + in_sz, 0:hid],
        w_xg=w_ref[r_g:r_g + hid, 0:4 * hid],              # x part of gate weight
        w_hg=w_ref[r_g + hid:r_g + 2 * hid, 0:4 * hid],    # h part of gate weight
        w_hz=w_ref[r_hz:r_hz + hid, 0:hid],
        w_head=w_ref[r_hd:r_hd + hid, :],                  # full 128-lane width
        b_fx=jnp.broadcast_to(b_all[0:1, 0:hid], (batch, hid)),
        b_gates=jnp.broadcast_to(b_all[1:2, 0:4 * hid], (batch, 4 * hid)),
        b_hz=jnp.broadcast_to(b_all[2:3, 0:hid], (batch, hid)),
        b_head=jnp.broadcast_to(b_all[3:4, :], (batch, lane)),
    )


# -----------------------------------------------------------------------------
# One cell step: 4 MXU matmuls, one full-width sigmoid pass, one tanh quarter.
# `head` is returned at full padded lane width (pad lanes are exactly 0).
# -----------------------------------------------------------------------------
def _cell_step(f, h, c, wts, geom):
    hid = geom["hid"]

    # x_k = relu(W_fx f + b)
    x = jnp.maximum(
        jnp.dot(f, wts["w_fx"], preferred_element_type=jnp.float32)
        + wts["b_fx"], 0.0)

    # gates = x @ Wx_gates + h @ Wh_gates + b   (columns [i | g | o | m])
    gates = (jnp.dot(x, wts["w_xg"], preferred_element_type=jnp.float32)
             + jnp.dot(h, wts["w_hg"], preferred_element_type=jnp.float32)
             + wts["b_gates"])
    sg = jax.nn.sigmoid(gates)                 # one EUP pass over all 4 blocks
    i_k = sg[:, 0:hid]
    g_k = sg[:, hid:2 * hid]                   # sigmoid, as in the spec
    o_k = sg[:, 2 * hid:3 * hid]
    m_k = jnp.tanh(gates[:, 3 * hid:4 * hid])

    cx = g_k * c + i_k * m_k
    hx = o_k * cx

    # z_k = relu(W_hz hx + b)
    z = jnp.maximum(
        jnp.dot(hx, wts["w_hz"], preferred_element_type=jnp.float32)
        + wts["b_hz"], 0.0)

    # head = [sx | Mx | 0-pad] at full lane width (lane-dense store downstream)
    head = (jnp.dot(z, wts["w_head"], preferred_element_type=jnp.float32)
            + wts["b_head"])
    return head, hx, cx


def _pack_state(hx, cx, state_lane):
    batch, hid = hx.shape
    pieces = [hx, cx]
    pad = state_lane - 2 * hid
    if pad > 0:
        pieces.append(jnp.zeros((batch, pad), jnp.float32))
    return jnp.concatenate(pieces, axis=-1)


# -----------------------------------------------------------------------------
# Single-step cell kernel (matches the PyTorch forward signature).
# Outputs are two lane-dense slabs: head (B, lane) and state = [hx | cx | pad].
# -----------------------------------------------------------------------------
def _cell_kernel(f_ref, h_ref, c_ref, w_ref, b_ref, head_ref, state_ref, *, geom):
    batch = f_ref.shape[0]
    wts = _load_weights(w_ref, b_ref, geom, batch)
    head, hx, cx = _cell_step(f_ref[...], h_ref[...], c_ref[...], wts, geom)
    head_ref[...] = head
    state_ref[...] = _pack_state(hx, cx, state_ref.shape[-1])


def stlstm_cell(f_k, M_k, h_k, c_k, packed):
    """Pallas STLSTMCell forward. M_k is unused by the reference forward; it is
    accepted for signature parity only. Returns (sx, Mx, hx, cx)."""
    del M_k
    W, B, geom = packed
    batch = f_k.shape[0]
    hid = geom["hid"]
    out_size = geom["out_size"]
    out_total = geom["out_total"]
    lane = geom["lane"]
    state_lane = _round_up(2 * hid, 128)

    vmem = pl.BlockSpec(memory_space=pltpu.MemorySpace.VMEM)
    head, state = pl.pallas_call(
        functools.partial(_cell_kernel, geom=geom),
        out_shape=(
            jax.ShapeDtypeStruct((batch, lane), jnp.float32),        # [sx|Mx|pad]
            jax.ShapeDtypeStruct((batch, state_lane), jnp.float32),  # [hx|cx|pad]
        ),
        in_specs=[vmem] * 5,
        out_specs=[vmem] * 2,
    )(f_k, h_k, c_k, W, B)

    sx = head[:, :out_size]
    Mx = head[:, out_size:out_total]
    hx = state[:, :hid]
    cx = state[:, hid:2 * hid]
    return sx, Mx, hx, cx


# -----------------------------------------------------------------------------
# Sequence-mode kernel: grid=(T//TB,); TB timesteps per grid step run in an
# in-kernel (partially unrolled) fori_loop; weights/biases DMA'd once (constant
# index maps); h/c carried in vregs within a block and in VMEM scratch across
# grid steps; final [h|c] slab written only on the last grid step.
# -----------------------------------------------------------------------------
def _seq_kernel(f_ref, h0_ref, c0_ref, w_ref, b_ref,
                head_ref, state_ref, h_sc, c_sc, *, geom, tb, unroll):
    t = pl.program_id(0)
    batch = h0_ref.shape[0]
    hid = geom["hid"]

    @pl.when(t == 0)
    def _():
        h_sc[...] = h0_ref[...]
        c_sc[...] = c0_ref[...]

    # Hoisted once per grid step (TB timesteps share these).
    wts = _load_weights(w_ref, b_ref, geom, batch)

    def body(s, carry):
        h, c = carry
        head, hx, cx = _cell_step(f_ref[s], h, c, wts, geom)
        head_ref[s] = head                      # full-lane-width (B, 128) store
        return hx, cx

    h_fin, c_fin = jax.lax.fori_loop(
        0, tb, body, (h_sc[...], c_sc[...]), unroll=unroll)

    h_sc[...] = h_fin
    c_sc[...] = c_fin

    @pl.when(t == pl.num_programs(0) - 1)
    def _():
        state_ref[...] = _pack_state(h_fin, c_fin, state_ref.shape[-1])


def stlstm_sequence(f_seq, h0, c0, packed, *, time_block=16, unroll=4):
    """Run the cell over f_seq of shape (T, batch, input_size) inside one
    pallas_call with the time axis blocked. Returns (sx_seq, Mx_seq, h_T, c_T)."""
    W, B, geom = packed
    T, batch, in_sz = f_seq.shape
    hid = geom["hid"]
    out_size = geom["out_size"]
    out_total = geom["out_total"]
    lane = geom["lane"]
    state_lane = _round_up(2 * hid, 128)

    # Largest divisor of T that is <= time_block (keeps blocks exact).
    tb = 1
    for d in range(1, min(time_block, T) + 1):
        if T % d == 0:
            tb = d
    num_blocks = T // tb
    unroll_amt = max(1, min(unroll, tb))

    grid_spec = pltpu.PrefetchScalarGridSpec(
        num_scalar_prefetch=0,
        grid=(num_blocks,),
        in_specs=[
            pl.BlockSpec((tb, batch, in_sz), lambda t: (t, 0, 0)),   # f chunk
            pl.BlockSpec((batch, hid), lambda t: (0, 0)),            # h0 (resident)
            pl.BlockSpec((batch, hid), lambda t: (0, 0)),            # c0 (resident)
            pl.BlockSpec(W.shape, lambda t: (0, 0)),                 # weights (resident)
            pl.BlockSpec(B.shape, lambda t: (0, 0)),                 # biases (resident)
        ],
        out_specs=[
            pl.BlockSpec((tb, batch, lane), lambda t: (t, 0, 0)),    # [sx|Mx|pad] chunk
            pl.BlockSpec((batch, state_lane), lambda t: (0, 0)),     # final [h|c|pad]
        ],
        scratch_shapes=[
            pltpu.VMEM((batch, hid), jnp.float32),   # carried h (across grid steps)
            pltpu.VMEM((batch, hid), jnp.float32),   # carried c
        ],
    )

    head_seq, state = pl.pallas_call(
        functools.partial(_seq_kernel, geom=geom, tb=tb, unroll=unroll_amt),
        out_shape=(
            jax.ShapeDtypeStruct((T, batch, lane), jnp.float32),
            jax.ShapeDtypeStruct((batch, state_lane), jnp.float32),
        ),
        grid_spec=grid_spec,
        compiler_params=pltpu.CompilerParams(
            dimension_semantics=("arbitrary",)),   # serial recurrence over time
    )(f_seq, h0, c0, W, B)

    sx_seq = head_seq[..., :out_size]
    Mx_seq = head_seq[..., out_size:out_total]
    hT = state[:, :hid]
    cT = state[:, hid:2 * hid]
    return sx_seq, Mx_seq, hT, cT


# -----------------------------------------------------------------------------
# Deterministic synthetic parameters matching nn.Linear shapes (stored
# transposed: (in, out)); biases as (1, out).
# -----------------------------------------------------------------------------
def init_params(key, input_size, hidden_size, output_size):
    layer_dims = {
        "fx": (input_size, hidden_size),
        "xi": (hidden_size, hidden_size), "hi": (hidden_size, hidden_size),
        "xg": (hidden_size, hidden_size), "hg": (hidden_size, hidden_size),
        "xo": (hidden_size, hidden_size), "ho": (hidden_size, hidden_size),
        "xm": (hidden_size, hidden_size), "hm": (hidden_size, hidden_size),
        "hz": (hidden_size, hidden_size),
        "zs": (hidden_size, output_size),
        "zm": (hidden_size, 6),
    }
    params = {}
    keys = jax.random.split(key, 2 * len(layer_dims))
    for idx, (name, (d_in, d_out)) in enumerate(layer_dims.items()):
        scale = 1.0 / jnp.sqrt(jnp.float32(d_in))
        params[f"w_{name}"] = (
            jax.random.normal(keys[2 * idx], (d_in, d_out), jnp.float32) * scale)
        params[f"b_{name}"] = (
            jax.random.normal(keys[2 * idx + 1], (1, d_out), jnp.float32) * scale)
    return params


# -----------------------------------------------------------------------------
# Pure-JAX references mirroring the PyTorch forward.
# -----------------------------------------------------------------------------
def stlstm_reference(f_k, M_k, h_k, c_k, p):
    del M_k
    lin = lambda x, w, b: x @ w + b
    x = jax.nn.relu(lin(f_k, p["w_fx"], p["b_fx"]))
    i_k = jax.nn.sigmoid(lin(x, p["w_xi"], p["b_xi"]) + lin(h_k, p["w_hi"], p["b_hi"]))
    g_k = jax.nn.sigmoid(lin(x, p["w_xg"], p["b_xg"]) + lin(h_k, p["w_hg"], p["b_hg"]))
    o_k = jax.nn.sigmoid(lin(x, p["w_xo"], p["b_xo"]) + lin(h_k, p["w_ho"], p["b_ho"]))
    m_k = jnp.tanh(lin(x, p["w_xm"], p["b_xm"]) + lin(h_k, p["w_hm"], p["b_hm"]))
    cx = g_k * c_k + i_k * m_k
    hx = o_k * cx
    z_k = jax.nn.relu(lin(hx, p["w_hz"], p["b_hz"]))
    sx = lin(z_k, p["w_zs"], p["b_zs"])
    Mx = lin(z_k, p["w_zm"], p["b_zm"])
    return sx, Mx, hx, cx


def stlstm_reference_seq(f_seq, h0, c0, p):
    def step(carry, f_t):
        h, c = carry
        sx, Mx, hx, cx = stlstm_reference(f_t, None, h, c, p)
        return (hx, cx), (sx, Mx)
    (hT, cT), (sx_seq, Mx_seq) = jax.lax.scan(step, (h0, c0), f_seq)
    return sx_seq, Mx_seq, hT, cT


if __name__ == "__main__":
    batch = 8
    input_size = 16
    hidden_size = 32
    output_size = 8
    seq_len = 32          # time axis; blocked into grid=(2,) with TB=16

    key = jax.random.PRNGKey(0)
    k_param, k_f, k_h, k_c, k_fseq = jax.random.split(key, 5)

    params = init_params(k_param, input_size, hidden_size, output_size)
    packed = pack_params(params, input_size, hidden_size, output_size)

    f_k = jax.random.normal(k_f, (batch, input_size), jnp.float32)
    # init_hidden equivalent: M_0 = [1,0,0,0,1,0] per batch row.
    M_k = jnp.tile(jnp.array([[1.0, 0.0, 0.0, 0.0, 1.0, 0.0]], jnp.float32),
                   (batch, 1))
    h_k = jax.random.normal(k_h, (batch, hidden_size), jnp.float32)
    c_k = jax.random.normal(k_c, (batch, hidden_size), jnp.float32)

    # ---- single-step cell (matches the PyTorch forward) ----
    sx, Mx, hx, cx = stlstm_cell(f_k, M_k, h_k, c_k, packed)
    jax.block_until_ready((sx, Mx, hx, cx))

    sx_r, Mx_r, hx_r, cx_r = stlstm_reference(f_k, M_k, h_k, c_k, params)
    for a, b in ((sx, sx_r), (Mx, Mx_r), (hx, hx_r), (cx, cx_r)):
        assert jnp.allclose(a, b, atol=1e-4, rtol=1e-4), "cell mismatch vs reference"

    # ---- sequence mode: time-blocked recurrence inside one pallas_call ----
    f_seq = jax.random.normal(k_fseq, (seq_len, batch, input_size), jnp.float32)
    sx_seq, Mx_seq, hT, cT = stlstm_sequence(f_seq, h_k, c_k, packed,
                                             time_block=16, unroll=4)
    jax.block_until_ready((sx_seq, Mx_seq, hT, cT))

    # Slightly looser tolerance: matmul rounding differences compound over T=32
    # recurrent steps (both sides are f32; no bf16 operands used).
    sx_sr, Mx_sr, hT_r, cT_r = stlstm_reference_seq(f_seq, h_k, c_k, params)
    for a, b in ((sx_seq, sx_sr), (Mx_seq, Mx_sr), (hT, hT_r), (cT, cT_r)):
        assert jnp.allclose(a, b, atol=2e-3, rtol=2e-3), "sequence mismatch vs reference"

    print("KERNEL_OK")
</pallas_src>

<mosaic_0001>
module attributes {stable_mosaic.version = 11 : i64} {
  func.func @_cell_kernel(%arg0: memref<8x16xf32, #tpu.memory_space<vmem>>, %arg1: memref<8x32xf32, #tpu.memory_space<vmem>>, %arg2: memref<8x32xf32, #tpu.memory_space<vmem>>, %arg3: memref<144x128xf32, #tpu.memory_space<vmem>>, %arg4: memref<8x128xf32, #tpu.memory_space<vmem>>, %arg5: memref<8x128xf32, #tpu.memory_space<vmem>>, %arg6: memref<8x128xf32, #tpu.memory_space<vmem>>) attributes {dimension_semantics = [], scalar_prefetch = 0 : i64, scratch_operands = 0 : i64, tpu.core_type = #tpu.core_type<tc>} {
    %c0 = arith.constant 0 : index
    %c0_0 = arith.constant 0 : index
    %0 = vector.load %arg4[%c0, %c0_0] : memref<8x128xf32, #tpu.memory_space<vmem>>, vector<8x128xf32>
    %c0_1 = arith.constant 0 : index
    %c0_2 = arith.constant 0 : index
    %1 = vector.load %arg3[%c0_1, %c0_2] : memref<144x128xf32, #tpu.memory_space<vmem>>, vector<16x32xf32>
    %c16 = arith.constant 16 : index
    %c0_3 = arith.constant 0 : index
    %2 = vector.load %arg3[%c16, %c0_3] : memref<144x128xf32, #tpu.memory_space<vmem>>, vector<32x128xf32>
    %c48 = arith.constant 48 : index
    %c0_4 = arith.constant 0 : index
    %3 = vector.load %arg3[%c48, %c0_4] : memref<144x128xf32, #tpu.memory_space<vmem>>, vector<32x128xf32>
    %c80 = arith.constant 80 : index
    %c0_5 = arith.constant 0 : index
    %4 = vector.load %arg3[%c80, %c0_5] : memref<144x128xf32, #tpu.memory_space<vmem>>, vector<32x32xf32>
    %c112 = arith.constant 112 : index
    %c0_6 = arith.constant 0 : index
    %5 = vector.load %arg3[%c112, %c0_6] : memref<144x128xf32, #tpu.memory_space<vmem>>, vector<32x128xf32>
    %6 = vector.extract_strided_slice %0 {offsets = [0, 0], sizes = [1, 32], strides = [1, 1]} : vector<8x128xf32> to vector<1x32xf32>
    %7 = vector.shape_cast %6 : vector<1x32xf32> to vector<1x32xf32>
    %8 = vector.broadcast %7 : vector<1x32xf32> to vector<8x32xf32>
    %9 = vector.extract_strided_slice %0 {offsets = [1, 0], sizes = [1, 128], strides = [1, 1]} : vector<8x128xf32> to vector<1x128xf32>
    %10 = vector.shape_cast %9 : vector<1x128xf32> to vector<1x128xf32>
    %11 = vector.broadcast %10 : vector<1x128xf32> to vector<8x128xf32>
    %12 = vector.extract_strided_slice %0 {offsets = [2, 0], sizes = [1, 32], strides = [1, 1]} : vector<8x128xf32> to vector<1x32xf32>
    %13 = vector.shape_cast %12 : vector<1x32xf32> to vector<1x32xf32>
    %14 = vector.broadcast %13 : vector<1x32xf32> to vector<8x32xf32>
    %15 = vector.extract_strided_slice %0 {offsets = [3, 0], sizes = [1, 128], strides = [1, 1]} : vector<8x128xf32> to vector<1x128xf32>
    %16 = vector.shape_cast %15 : vector<1x128xf32> to vector<1x128xf32>
    %17 = vector.broadcast %16 : vector<1x128xf32> to vector<8x128xf32>
    %c0_7 = arith.constant 0 : index
    %c0_8 = arith.constant 0 : index
    %18 = vector.load %arg0[%c0_7, %c0_8] : memref<8x16xf32, #tpu.memory_space<vmem>>, vector<8x16xf32>
    %c0_9 = arith.constant 0 : index
    %c0_10 = arith.constant 0 : index
    %19 = vector.load %arg1[%c0_9, %c0_10] : memref<8x32xf32, #tpu.memory_space<vmem>>, vector<8x32xf32>
    %c0_11 = arith.constant 0 : index
    %c0_12 = arith.constant 0 : index
    %20 = vector.load %arg2[%c0_11, %c0_12] : memref<8x32xf32, #tpu.memory_space<vmem>>, vector<8x32xf32>
    %cst = arith.constant dense<0.000000e+00> : vector<8x32xf32>
    %21 = tpu.matmul %18, %1, %cst {dimension_numbers = #tpu.dot_dimension_numbers<[1], [0], [0], [1], [0, 0, 1, 1], [], []>} : vector<8x16xf32>, vector<16x32xf32>, vector<8x32xf32> -> vector<8x32xf32>
    %22 = arith.addf %21, %8 : vector<8x32xf32>
    %cst_13 = arith.constant 0.000000e+00 : f32
    %23 = vector.broadcast %cst_13 : f32 to vector<8x32xf32>
    %24 = arith.maximumf %22, %23 : vector<8x32xf32>
    %cst_14 = arith.constant dense<0.000000e+00> : vector<8x128xf32>
    %25 = tpu.matmul %24, %2, %cst_14 {dimension_numbers = #tpu.dot_dimension_numbers<[1], [0], [0], [1], [0, 0, 1, 1], [], []>} : vector<8x32xf32>, vector<32x128xf32>, vector<8x128xf32> -> vector<8x128xf32>
    %cst_15 = arith.constant dense<0.000000e+00> : vector<8x128xf32>
    %26 = tpu.matmul %19, %3, %cst_15 {dimension_numbers = #tpu.dot_dimension_numbers<[1], [0], [0], [1], [0, 0, 1, 1], [], []>} : vector<8x32xf32>, vector<32x128xf32>, vector<8x128xf32> -> vector<8x128xf32>
    %27 = arith.addf %25, %26 : vector<8x128xf32>
    %28 = arith.addf %27, %11 : vector<8x128xf32>
    %29 = arith.negf %28 : vector<8x128xf32>
    %30 = math.exp %29 : vector<8x128xf32>
    %cst_16 = arith.constant 1.000000e+00 : f32
    %31 = vector.broadcast %cst_16 : f32 to vector<8x128xf32>
    %32 = arith.addf %31, %30 : vector<8x128xf32>
    %33 = arith.divf %31, %32 : vector<8x128xf32>
    %34 = vector.extract_strided_slice %33 {offsets = [0, 0], sizes = [8, 32], strides = [1, 1]} : vector<8x128xf32> to vector<8x32xf32>
    %35 = vector.extract_strided_slice %33 {offsets = [0, 32], sizes = [8, 32], strides = [1, 1]} : vector<8x128xf32> to vector<8x32xf32>
    %36 = vector.extract_strided_slice %33 {offsets = [0, 64], sizes = [8, 32], strides = [1, 1]} : vector<8x128xf32> to vector<8x32xf32>
    %37 = vector.extract_strided_slice %28 {offsets = [0, 96], sizes = [8, 32], strides = [1, 1]} : vector<8x128xf32> to vector<8x32xf32>
    %38 = math.tanh %37 : vector<8x32xf32>
    %39 = arith.mulf %35, %20 : vector<8x32xf32>
    %40 = arith.mulf %34, %38 : vector<8x32xf32>
    %41 = arith.addf %39, %40 : vector<8x32xf32>
    %42 = arith.mulf %36, %41 : vector<8x32xf32>
    %cst_17 = arith.constant dense<0.000000e+00> : vector<8x32xf32>
    %43 = tpu.matmul %42, %4, %cst_17 {dimension_numbers = #tpu.dot_dimension_numbers<[1], [0], [0], [1], [0, 0, 1, 1], [], []>} : vector<8x32xf32>, vector<32x32xf32>, vector<8x32xf32> -> vector<8x32xf32>
    %44 = arith.addf %43, %14 : vector<8x32xf32>
    %cst_18 = arith.constant 0.000000e+00 : f32
    %45 = vector.broadcast %cst_18 : f32 to vector<8x32xf32>
    %46 = arith.maximumf %44, %45 : vector<8x32xf32>
    %cst_19 = arith.constant dense<0.000000e+00> : vector<8x128xf32>
    %47 = tpu.matmul %46, %5, %cst_19 {dimension_numbers = #tpu.dot_dimension_numbers<[1], [0], [0], [1], [0, 0, 1, 1], [], []>} : vector<8x32xf32>, vector<32x128xf32>, vector<8x128xf32> -> vector<8x128xf32>
    %48 = arith.addf %47, %17 : vector<8x128xf32>
    %c0_20 = arith.constant 0 : index
    %c0_21 = arith.constant 0 : index
    %49 = vector.load %arg5[%c0_20, %c0_21] : memref<8x128xf32, #tpu.memory_space<vmem>>, vector<8x128xf32>
    tpu.vector_store %arg5[%c0_20, %c0_21], %48 {strides = array<i32>} : memref<8x128xf32, #tpu.memory_space<vmem>>, vector<8x128xf32>,
    %cst_22 = arith.constant 0.000000e+00 : f32
    %50 = vector.broadcast %cst_22 : f32 to vector<8x64xf32>
    %51 = tpu.concatenate %42, %41, %50 in 1 : vector<8x32xf32>, vector<8x32xf32>, vector<8x64xf32> -> vector<8x128xf32>
    %c0_23 = arith.constant 0 : index
    %c0_24 = arith.constant 0 : index
    %52 = vector.load %arg6[%c0_23, %c0_24] : memref<8x128xf32, #tpu.memory_space<vmem>>, vector<8x128xf32>
    tpu.vector_store %arg6[%c0_23, %c0_24], %51 {strides = array<i32>} : memref<8x128xf32, #tpu.memory_space<vmem>>, vector<8x128xf32>,
    return
  }
}

</mosaic_0001>

<llo_original>
// kernel: tpu_custom_call.1
$region0: #{tpu_custom_call.1}
  #allocation0 [shape = 'u32[]', space=smem, size = 0x4, offset = 0x4, fixed_abs, tag = 'smem constant byte address 0x4 - core index']
  #allocation1 [shape = 'u32[72,128]{1,0:T(1,128)}', space=vmem, size = 0x9000, scoped, tag = 'internal scratch']
  %s0 = inlined_call_operand.hbm [shape: f32[8,16], index: 0, kind: input, shape index: {}]
  %s1 = inlined_call_operand.hbm [shape: f32[8,32], index: 1, kind: input, shape index: {}]
  %s2 = inlined_call_operand.hbm [shape: f32[8,32], index: 2, kind: input, shape index: {}]
  %s3 = inlined_call_operand.hbm [shape: f32[144,128], index: 3, kind: input, shape index: {}]
  %s4 = inlined_call_operand.hbm [shape: f32[8,128], index: 4, kind: input, shape index: {}]
  %s5 = inlined_call_operand.hbm [shape: f32[8,128], index: 5, kind: output, shape index: {0}]
  %s6 = inlined_call_operand.hbm [shape: f32[8,128], index: 6, kind: output, shape index: {1}]
  %7 = xla_tuple %s5, %s6
  %s8 = sld [smem:[#allocation0]]
  $region58: #{tpu_custom_call.1} parent=0
    _
  %s10 = ssub.s32 1, %s8
  %s11 = scalar_select 0, %s10, %s8
  $region1: #{tpu_custom_call.1} parent=0
    #allocation2 [shape = 'u8[4096]{0}', space=vmem, size = 0x1000, scoped, tag = 'input window, operand 0, single buffered']
    #allocation3 [shape = 's32[1]{0}', space=sflag, size = 0x4, scoped, tag = 'scoped memory for tpu_custom_call.1']
    #allocation4 [shape = 's32[1]{0}', space=sflag, size = 0x4, scoped, tag = 'scoped memory for tpu_custom_call.1']
    #allocation5 [shape = 'u8[4096]{0}', space=vmem, size = 0x1000, scoped, tag = 'input window, operand 1, single buffered']
    #allocation6 [shape = 's32[1]{0}', space=sflag, size = 0x4, scoped, tag = 'scoped memory for tpu_custom_call.1']
    #allocation7 [shape = 'u8[4096]{0}', space=vmem, size = 0x1000, scoped, tag = 'input window, operand 2, single buffered']
    #allocation8 [shape = 'u8[73728]{0}', space=vmem, size = 0x12000, scoped, tag = 'input window, operand 3, single buffered']
    #allocation9 [shape = 's32[1]{0}', space=sflag, size = 0x4, scoped, tag = 'scoped memory for tpu_custom_call.1']
    #allocation10 [shape = 'u8[4096]{0}', space=vmem, size = 0x1000, scoped, tag = 'input window, operand 4, single buffered']
    #allocation11 [shape = 'u8[4096]{0}', space=vmem, size = 0x1000, scoped, tag = 'output window, operand 0, single buffered']
    #allocation12 [shape = 'u8[4096]{0}', space=vmem, size = 0x1000, scoped, tag = 'output window, operand 1, single buffered']
    #allocation13 [shape = 's32[1]{0}', space=sflag, size = 0x4, scoped, tag = 'scoped memory for tpu_custom_call.1']
    %12 = vsyncpa [#allocation3], 0
    %13 = vsyncpa [#allocation6], 0
    %14 = vsyncpa [#allocation9], 0
    %15 = vsyncpa [#allocation4], 0
    %16 = vsyncpa [#allocation13], 0
    // Predicated region
    $region2: #{tpu_custom_call.1} parent=1 // pred_check
      _
    $region3: #{tpu_custom_call.1} parent=1 // pred_check_branch
      %18 = sbr.rel (0) target = $region5
    $region4: #{tpu_custom_call.1} parent=1 // pred_region
      %20 = vsyncadd [#allocation3], 0
      %s22 = sshll.u32 %s0, 4
      %s23 = int_to_ptr.hbm [resolvable:$true] %s22
      %s24 = sshll.u32 [#allocation2], 4
      %s25 = int_to_ptr.vmem [resolvable:$true] %s24
      %27 = dma.hbm_to_vmem [thread:$0]  %s23, 128, %s25, [#allocation3]
    $region5: #{tpu_custom_call.1} parent=1 // pred_fallthru
      _
    // Predicated region
    $region6: #{tpu_custom_call.1} parent=1 // pred_check
      _
    $region7: #{tpu_custom_call.1} parent=1 // pred_check_branch
      %29 = sbr.rel (0) target = $region9
    $region8: #{tpu_custom_call.1} parent=1 // pred_region
      %31 = vsyncadd [#allocation6], 0
      %s33 = sshll.u32 %s1, 4
      %s34 = int_to_ptr.hbm [resolvable:$true] %s33
      %s35 = sshll.u32 [#allocation5], 4
      %s36 = int_to_ptr.vmem [resolvable:$true] %s35
      %38 = dma.hbm_to_vmem [thread:$0]  %s34, 128, %s36, [#allocation6]
    $region9: #{tpu_custom_call.1} parent=1 // pred_fallthru
      _
    // Predicated region
    $region10: #{tpu_custom_call.1} parent=1 // pred_check
      _
    $region11: #{tpu_custom_call.1} parent=1 // pred_check_branch
      %40 = sbr.rel (0) target = $region13
    $region12: #{tpu_custom_call.1} parent=1 // pred_region
      %42 = vsyncadd [#allocation6], 0
      %s44 = sshll.u32 %s2, 4
      %s45 = int_to_ptr.hbm [resolvable:$true] %s44
      %s46 = sshll.u32 [#allocation7], 4
      %s47 = int_to_ptr.vmem [resolvable:$true] %s46
      %49 = dma.hbm_to_vmem [thread:$0]  %s45, 128, %s47, [#allocation6]
    $region13: #{tpu_custom_call.1} parent=1 // pred_fallthru
      _
    // Predicated region
    $region14: #{tpu_custom_call.1} parent=1 // pred_check
      _
    $region15: #{tpu_custom_call.1} parent=1 // pred_check_branch
      %51 = sbr.rel (0) target = $region17
    $region16: #{tpu_custom_call.1} parent=1 // pred_region
      %53 = vsyncadd [#allocation9], 0
      %s54 = sshll.u32 %s3, 4
      %s55 = int_to_ptr.hbm [resolvable:$true] %s54
      %s56 = sshll.u32 [#allocation8], 4
      %s57 = int_to_ptr.vmem [resolvable:$true] %s56
      %62 = dma.hbm_to_vmem [thread:$0]  %s55, 2304, %s57, [#allocation9], 128, 128, 8
    $region17: #{tpu_custom_call.1} parent=1 // pred_fallthru
      _
    // Predicated region
    $region18: #{tpu_custom_call.1} parent=1 // pred_check
      _
    $region19: #{tpu_custom_call.1} parent=1 // pred_check_branch
      %64 = sbr.rel (0) target = $region21
    $region20: #{tpu_custom_call.1} parent=1 // pred_region
      %66 = vsyncadd [#allocation9], 0
      %s68 = sshll.u32 %s4, 4
      %s69 = int_to_ptr.hbm [resolvable:$true] %s68
      %s70 = sshll.u32 [#allocation10], 4
      %s71 = int_to_ptr.vmem [resolvable:$true] %s70
      %73 = dma.hbm_to_vmem [thread:$0]  %s69, 128, %s71, [#allocation9]
    $region21: #{tpu_custom_call.1} parent=1 // pred_fallthru
      _
    // Predicated region
    $region22: #{tpu_custom_call.1} parent=1 // pred_check
      _
    $region23: #{tpu_custom_call.1} parent=1 // pred_check_branch
      %75 = sbr.rel (0) target = $region25
    $region24: #{tpu_custom_call.1} parent=1 // pred_region
      %77 = dma.done [#allocation3], 128
    $region25: #{tpu_custom_call.1} parent=1 // pred_fallthru
      _
    // Predicated region
    $region26: #{tpu_custom_call.1} parent=1 // pred_check
      _
    $region27: #{tpu_custom_call.1} parent=1 // pred_check_branch
      %79 = sbr.rel (0) target = $region29
    $region28: #{tpu_custom_call.1} parent=1 // pred_region
      %81 = dma.done [#allocation6], 128
    $region29: #{tpu_custom_call.1} parent=1 // pred_fallthru
      _
    // Predicated region
    $region30: #{tpu_custom_call.1} parent=1 // pred_check
      _
    $region31: #{tpu_custom_call.1} parent=1 // pred_check_branch
      %83 = sbr.rel (0) target = $region33
    $region32: #{tpu_custom_call.1} parent=1 // pred_region
      %85 = dma.done [#allocation6], 128
    $region33: #{tpu_custom_call.1} parent=1 // pred_fallthru
      _
    // Predicated region
    $region34: #{tpu_custom_call.1} parent=1 // pred_check
      _
    $region35: #{tpu_custom_call.1} parent=1 // pred_check_branch
      %87 = sbr.rel (0) target = $region37
    $region36: #{tpu_custom_call.1} parent=1 // pred_region
      %89 = dma.done [#allocation9], 2304
    $region37: #{tpu_custom_call.1} parent=1 // pred_fallthru
      _
    // Predicated region
    $region38: #{tpu_custom_call.1} parent=1 // pred_check
      _
    $region39: #{tpu_custom_call.1} parent=1 // pred_check_branch
      %91 = sbr.rel (0) target = $region41
    $region40: #{tpu_custom_call.1} parent=1 // pred_region
      %93 = dma.done [#allocation9], 128
    $region41: #{tpu_custom_call.1} parent=1 // pred_fallthru
      _
    %v94 = vld [vmem:[#allocation10] sm:$0xff]
    %v95 = vld [vmem:[#allocation8] sm:$0xff]
    %v96 = vld [vmem:[#allocation8 + $0x8] sm:$0xff]
    %v97 = vld [vmem:[#allocation8 + $0x10] sm:$0xff]
    %v98 = vld [vmem:[#allocation8 + $0x18] sm:$0xff]
    %v99 = vld [vmem:[#allocation8 + $0x20] sm:$0xff]
    %v100 = vld [vmem:[#allocation8 + $0x28] sm:$0xff]
    %v101 = vld [vmem:[#allocation8 + $0x30] sm:$0xff]
    %v102 = vld [vmem:[#allocation8 + $0x38] sm:$0xff]
    %v103 = vld [vmem:[#allocation8 + $0x40] sm:$0xff]
    %v104 = vld [vmem:[#allocation8 + $0x48] sm:$0xff]
    %v105 = vld [vmem:[#allocation8 + $0x50] sm:$0xff]
    %v106 = vld [vmem:[#allocation8 + $0x58] sm:$0xff]
    %v107 = vld [vmem:[#allocation8 + $0x60] sm:$0xff]
    %v108 = vld [vmem:[#allocation8 + $0x68] sm:$0xff]
    %v109 = vld [vmem:[#allocation8 + $0x70] sm:$0xff]
    %v110 = vld [vmem:[#allocation8 + $0x78] sm:$0xff]
    %v111 = vld [vmem:[#allocation8 + $0x80] sm:$0xff]
    %v112 = vld [vmem:[#allocation8 + $0x88] sm:$0xff]
    %v113 = vperm.slane %v94, 0
    %v114 = vperm.slane %v94, 1
    %v115 = vperm.slane %v94, 2
    %v116 = vperm.slane %v94, 3
    %v117 = vld [vmem:[#allocation2] sm:$0xff]
    %v118 = vld [vmem:[#allocation5] sm:$0xff]
    %v119 = vld [vmem:[#allocation7] sm:$0xff]
    %vm120 = vcmask 130048
    %v122 = vsel %vm120, %v117, 0
    %124 = vmatpush.msra.mxu0 0.0
    %125 = vmatpush.msra.mxu0 0.0
    %126 = vmatpush.msra.mxu0 0.0
    %127 = vmatpush.msra.mxu0 0.0
    %128 = vmatpush.msra.mxu0 0.0
    %129 = vmatpush.msra.mxu0 0.0
    %130 = vmatpush.msra.mxu0 0.0
    %131 = vmatpush.msra.mxu0 0.0
    %132 = vmatpush.msra.mxu0 0.0
    %133 = vmatpush.msra.mxu0 0.0
    %134 = vmatpush.msra.mxu0 0.0
    %135 = vmatpush.msra.mxu0 0.0
    %136 = vmatpush.msra.mxu0 0.0
    %137 = vmatpush.msra.mxu0 0.0
    %138 = vmatpush.msra.mxu0 %v96
    %139 = vmatpush.msra.mxu0 %v95
    %140 = vmatmul.f32.gmra.mxu0 %v122
    %v141 = vpop.f32.mrf.mxu0
    %v142 = vadd.f32 %v113, %v141
    %143 = vdwg.mxu0
    %v144 = vmax.f32 %v142, 0.0
    %vm145 = vcmask 261120
    %v147 = vsel %vm145, %v118, 0
    %149 = vmatpush.msra.mxu0 0.0
    %150 = vmatpush.msra.mxu0 0.0
    %151 = vmatpush.msra.mxu0 0.0
    %152 = vmatpush.msra.mxu0 0.0
    %153 = vmatpush.msra.mxu0 0.0
    %154 = vmatpush.msra.mxu0 0.0
    %155 = vmatpush.msra.mxu0 0.0
    %156 = vmatpush.msra.mxu0 0.0
    %157 = vmatpush.msra.mxu0 0.0
    %158 = vmatpush.msra.mxu0 0.0
    %159 = vmatpush.msra.mxu0 0.0
    %160 = vmatpush.msra.mxu0 0.0
    %161 = vmatpush.msra.mxu0 %v104
    %162 = vmatpush.msra.mxu0 %v103
    %163 = vmatpush.msra.mxu0 %v102
    %164 = vmatpush.msra.mxu0 %v101
    %165 = vmatmul.f32.gmra.mxu0 %v147
    %v166 = vpop.f32.mrf.mxu0
    %v167 = vadd.f32 0.0, %v166
    %168 = vdwg.mxu0
    %v170 = vsel %vm145, %v144, 0
    %172 = vmatpush.msra.mxu0 0.0
    %173 = vmatpush.msra.mxu0 0.0
    %174 = vmatpush.msra.mxu0 0.0
    %175 = vmatpush.msra.mxu0 0.0
    %176 = vmatpush.msra.mxu0 0.0
    %177 = vmatpush.msra.mxu0 0.0
    %178 = vmatpush.msra.mxu0 0.0
    %179 = vmatpush.msra.mxu0 0.0
    %180 = vmatpush.msra.mxu0 0.0
    %181 = vmatpush.msra.mxu0 0.0
    %182 = vmatpush.msra.mxu0 0.0
    %183 = vmatpush.msra.mxu0 0.0
    %184 = vmatpush.msra.mxu0 %v100
    %185 = vmatpush.msra.mxu0 %v99
    %186 = vmatpush.msra.mxu0 %v98
    %187 = vmatpush.msra.mxu0 %v97
    %188 = vmatmul.f32.gmra.mxu0 %v170
    %v189 = vpop.f32.mrf.mxu0
    %v190 = vadd.f32 %v167, %v189
    %191 = vdwg.mxu0
    %v192 = vadd.f32 %v190, %v114
    %v193 = vxor.u32 %v192, 2147483648
    %v194 = vmul.f32 %v193, 1.442695
    %v195 = vpow.pop %v194
    %v196 = vadd.f32 %v195, 1.0
    %v197 = vrcp.pop %v196
    %v198 = vmul.f32 %v196, %v197
    %v199 = vsub.f32 1.0, %v198
    %v200 = vmul.f32 %v197, %v199
    %v201 = vadd.f32 %v197, %v200
    %vm202 = vweird.f32 %v196
    %vm203 = vweird.f32 %v197
    %vm204 = vmor %vm202, %vm203
    %v205 = vsel %vm204, %v197, %v201
    %v206 = vand.u32 2147483647, %v196
    %vm207 = vcmp.eq.f32.partialorder %v206, 8.507059e+37
    %v208 = vand.u32 %v196, 2147483648
    %v209 = vor.u32 1.1754944e-38, %v208
    %v210 = vsel %vm207, %v209, %v205
    %v211 = vmul.f32 1.0, %v210
    %v212 = vtanh.pop %v192
    %214 = vrot.lane.b32.xlu0 %v119, 32
    %v215 = vpop.permute.xlu0 %214
    %v217 = vmul.f32 %v211, %v215
    %219 = vrot.lane.b32.xlu0 %v212, 32
    %v220 = vpop.permute.xlu0 %219
    %v222 = vmul.f32 %v211, %v220
    %224 = vrot.lane.b32.xlu0 %v222, 32
    %v225 = vpop.permute.xlu0 %224
    %v227 = vadd.f32 %v217, %v225
    %229 = vrot.lane.b32.xlu0 %v227, 32
    %v230 = vpop.permute.xlu0 %229
    %v232 = vmul.f32 %v211, %v230
    %234 = vrot.lane.b32.xlu0 %v232, 64
    %v235 = vpop.permute.xlu0 %234
    %v236 = vsel %vm145, %v235, 0
    %238 = vmatpush.msra.mxu0 0.0
    %239 = vmatpush.msra.mxu0 0.0
    %240 = vmatpush.msra.mxu0 0.0
    %241 = vmatpush.msra.mxu0 0.0
    %242 = vmatpush.msra.mxu0 0.0
    %243 = vmatpush.msra.mxu0 0.0
    %244 = vmatpush.msra.mxu0 0.0
    %245 = vmatpush.msra.mxu0 0.0
    %246 = vmatpush.msra.mxu0 0.0
    %247 = vmatpush.msra.mxu0 0.0
    %248 = vmatpush.msra.mxu0 0.0
    %249 = vmatpush.msra.mxu0 0.0
    %250 = vmatpush.msra.mxu0 %v108
    %251 = vmatpush.msra.mxu0 %v107
    %252 = vmatpush.msra.mxu0 %v106
    %253 = vmatpush.msra.mxu0 %v105
    %254 = vmatmul.f32.gmra.mxu0 %v236
    %v255 = vpop.f32.mrf.mxu0
    %v256 = vadd.f32 %v115, %v255
    %257 = vdwg.mxu0
    %v258 = vmax.f32 %v256, 0.0
    %v260 = vsel %vm145, %v258, 0
    %262 = vmatpush.msra.mxu0 0.0
    %263 = vmatpush.msra.mxu0 0.0
    %264 = vmatpush.msra.mxu0 0.0
    %265 = vmatpush.msra.mxu0 0.0
    %266 = vmatpush.msra.mxu0 0.0
    %267 = vmatpush.msra.mxu0 0.0
    %268 = vmatpush.msra.mxu0 0.0
    %269 = vmatpush.msra.mxu0 0.0
    %270 = vmatpush.msra.mxu0 0.0
    %271 = vmatpush.msra.mxu0 0.0
    %272 = vmatpush.msra.mxu0 0.0
    %273 = vmatpush.msra.mxu0 0.0
    %274 = vmatpush.msra.mxu0 %v112
    %275 = vmatpush.msra.mxu0 %v111
    %276 = vmatpush.msra.mxu0 %v110
    %277 = vmatpush.msra.mxu0 %v109
    %278 = vmatmul.f32.gmra.mxu0 %v260
    %v279 = vpop.f32.mrf.mxu0
    %v280 = vadd.f32 %v116, %v279
    %281 = vdwg.mxu0
    %282 = vst [vmem:[#allocation11] sm:$0xff] %v280
    %v284 = vsel %vm145, %v235, %v227
    %vm285 = vcmask 523264
    %v286 = vsel %vm285, %v284, 0.0
    %287 = vst [vmem:[#allocation12] sm:$0xff] %v286
    // Predicated region
    $region42: #{tpu_custom_call.1} parent=1 // pred_check
      _
    $region43: #{tpu_custom_call.1} parent=1 // pred_check_branch
      %289 = sbr.rel (0) target = $region45
    $region44: #{tpu_custom_call.1} parent=1 // pred_region
      %291 = vsyncadd [#allocation4], 0
      %s293 = sshll.u32 [#allocation11], 4
      %s294 = int_to_ptr.vmem [resolvable:$true] %s293
      %s295 = sshll.u32 %s5, 4
      %s296 = int_to_ptr.hbm [resolvable:$true] %s295
      %298 = dma.vmem_to_hbm [thread:$0]  %s294, 128, %s296, [#allocation4]
    $region45: #{tpu_custom_call.1} parent=1 // pred_fallthru
      _
    // Predicated region
    $region46: #{tpu_custom_call.1} parent=1 // pred_check
      _
    $region47: #{tpu_custom_call.1} parent=1 // pred_check_branch
      %300 = sbr.rel (0) target = $region49
    $region48: #{tpu_custom_call.1} parent=1 // pred_region
      %302 = vsyncadd [#allocation13], 0
      %s304 = sshll.u32 [#allocation12], 4
      %s305 = int_to_ptr.vmem [resolvable:$true] %s304
      %s306 = sshll.u32 %s6, 4
      %s307 = int_to_ptr.hbm [resolvable:$true] %s306
      %309 = dma.vmem_to_hbm [thread:$0]  %s305, 128, %s307, [#allocation13]
    $region49: #{tpu_custom_call.1} parent=1 // pred_fallthru
      _
    // Predicated region
    $region50: #{tpu_custom_call.1} parent=1 // pred_check
      _
    $region51: #{tpu_custom_call.1} parent=1 // pred_check_branch
      %311 = sbr.rel (0) target = $region53
    $region52: #{tpu_custom_call.1} parent=1 // pred_region
      %313 = dma.done [#allocation4], 128
    $region53: #{tpu_custom_call.1} parent=1 // pred_fallthru
      _
    // Predicated region
    $region54: #{tpu_custom_call.1} parent=1 // pred_check
      _
    $region55: #{tpu_custom_call.1} parent=1 // pred_check_branch
      %315 = sbr.rel (0) target = $region57
    $region56: #{tpu_custom_call.1} parent=1 // pred_region
      %317 = dma.done [#allocation13], 128
    $region57: #{tpu_custom_call.1} parent=1 // pred_fallthru
      _
    %318 = vsyncpa [#allocation3], 1
    %319 = vsyncpa [#allocation6], 1
    %320 = vsyncpa [#allocation9], 1
    %321 = vsyncpa [#allocation4], 1
    %322 = vsyncpa [#allocation13], 1

</llo_original>
